<compile_context>
chip_gen: v7x
topology: tpu7x:2x2x1
jax: 0.10.0
libtpu: 0.0.40
codegen_flags: <defaults>
</compile_context>

<pallas_src>
import jax
import jax.numpy as jnp
from jax.experimental import pallas as pl
from jax.experimental.pallas import tpu as pltpu


def _round_up(x, m):
    return ((x + m - 1) // m) * m


# ----------------------------------------------------------------------------
# Fused kernel: one-hot gather (folded linear1) -> +b1 -> ReLU -> linear2
# ----------------------------------------------------------------------------
def _make_fused_kernel(pos_vpads, pos_offsets):
    n_pos = len(pos_vpads)

    def kernel(feat_ref, wfold_ref, b1_ref, w2_ref, b2_ref, o_ref, onehot_ref):
        tb = feat_ref.shape[0]
        feat = feat_ref[...]                                   # [TB, W] int32
        oh_dtype = onehot_ref.dtype

        # Hoisted iotas: one per distinct padded vocab size (never rebuilt
        # inside the position loop -> frees vregs at TB=128).
        iotas = {vp: jax.lax.broadcasted_iota(jnp.int32, (tb, vp), 1)
                 for vp in sorted(set(pos_vpads))}

        # Build the concatenated one-hot gather operand [TB, K_total] in VMEM.
        for p in range(n_pos):
            vp = pos_vpads[p]
            off = pos_offsets[p]
            idx = feat[:, p:p + 1]                             # [TB, 1]
            onehot_ref[:, off:off + vp] = (iotas[vp] == idx).astype(oh_dtype)

        # Fused gather + linear1: a single MXU matmul with K = K_total.
        h = jnp.dot(onehot_ref[...], wfold_ref[...],
                    preferred_element_type=jnp.float32)        # [TB, Hp] f32
        h = jnp.maximum(h + b1_ref[...], 0.0)                  # ReLU (VPU f32)

        out = jnp.dot(h.astype(w2_ref.dtype), w2_ref[...],
                      preferred_element_type=jnp.float32) + b2_ref[...]
        # TODO(synk): optionally emit bf16 logits to halve padded writeback at
        # large B (breaks the 1e-5 f32 parity check, so kept f32 here).
        o_ref[...] = out.astype(o_ref.dtype)                   # lane-dense vst

    return kernel


def fused_window_mlp(features, wfold, b1_p, w2_p, b2_p, pos_vpads, pos_offsets):
    """features: [B, W] int32; padded/folded params; returns [B_pad, O_pad] f32."""
    B, W = features.shape
    K_total, Hp = wfold.shape
    Op = w2_p.shape[1]

    # Batch tile: cap at 128 (f32 one-hot vreg/VMEM budget) and guarantee the
    # grid has >= 2 steps so small batches still pipeline and shard across
    # both v7x TensorCores.
    tb = min(128, _round_up(pl.cdiv(B, 2), 8))
    b_pad = max(_round_up(B, tb), 2 * tb)
    if b_pad != B:
        # pad rows with index 0 (valid padding_idx row); sliced off by caller
        features = jnp.pad(features, ((0, b_pad - B), (0, 0)))
    grid = (b_pad // tb,)

    # TODO(synk): mark the constant-index weight specs pipeline_mode=pl.Buffered(1)
    # once vocab/hidden sizes scale (v7x 64 MiB VMEM); irrelevant at <1 MB today.
    in_specs = [
        pl.BlockSpec((tb, W), lambda i: (i, 0)),               # streamed batch
        pl.BlockSpec((K_total, Hp), lambda i: (0, 0)),         # resident Wfold
        pl.BlockSpec((1, Hp), lambda i: (0, 0)),               # b1
        pl.BlockSpec((Hp, Op), lambda i: (0, 0)),              # W2
        pl.BlockSpec((1, Op), lambda i: (0, 0)),               # b2
    ]

    flops = 2 * b_pad * (K_total * Hp + Hp * Op)
    bytes_acc = (features.size * 4 + b_pad * Op * 4
                 + wfold.size * wfold.dtype.itemsize
                 + w2_p.size * w2_p.dtype.itemsize
                 + (b1_p.size + b2_p.size) * 4)

    return pl.pallas_call(
        _make_fused_kernel(tuple(pos_vpads), tuple(pos_offsets)),
        out_shape=jax.ShapeDtypeStruct((b_pad, Op), jnp.float32),
        grid=grid,
        in_specs=in_specs,
        out_specs=pl.BlockSpec((tb, Op), lambda i: (i, 0)),
        scratch_shapes=[pltpu.VMEM((tb, K_total), wfold.dtype)],
        compiler_params=pltpu.CompilerParams(
            dimension_semantics=("parallel",)),
        cost_estimate=pl.CostEstimate(flops=int(flops), transcendentals=0,
                                      bytes_accessed=int(bytes_acc)),
    )(features, wfold, b1_p, w2_p, b2_p)


# ----------------------------------------------------------------------------
# FixedWindowModel wrapper (holds params, folds/pads them once, calls kernel)
# ----------------------------------------------------------------------------
class FixedWindowModelPallas:
    def __init__(self, embedding_specs, hidden_dim, output_dim, key,
                 mxu_dtype=jnp.float32):
        # embedding_specs: list of (window_i, num_words, embedding_dim)
        self.window_sizes = [i for i, _, _ in embedding_specs]
        self.emb_dims = [e for _, _, e in embedding_specs]
        self.emb_len_list = [i * e for i, _, e in embedding_specs]
        concat_dim = sum(self.emb_len_list)
        self.hidden_dim = hidden_dim
        self.output_dim = output_dim

        keys = jax.random.split(key, len(embedding_specs) + 4)
        # Embedding tables: normal(std=0.01), padding_idx=0 row zeroed.
        self.emb_tables = []
        for k, (i, num_words, emb_dim) in zip(keys[:len(embedding_specs)],
                                              embedding_specs):
            w = 0.01 * jax.random.normal(k, (num_words, emb_dim), jnp.float32)
            w = w.at[0].set(0.0)
            self.emb_tables.append(w)

        # Linear layers (PyTorch-style uniform bounds).
        k1, k2, k3, k4 = keys[len(embedding_specs):]
        bound1 = 1.0 / jnp.sqrt(concat_dim)
        bound2 = 1.0 / jnp.sqrt(hidden_dim)
        self.w1 = jax.random.uniform(k1, (concat_dim, hidden_dim),
                                     jnp.float32, -bound1, bound1)
        self.b1 = jax.random.uniform(k2, (1, hidden_dim),
                                     jnp.float32, -bound1, bound1)
        self.w2 = jax.random.uniform(k3, (hidden_dim, output_dim),
                                     jnp.float32, -bound2, bound2)
        self.b2 = jax.random.uniform(k4, (1, output_dim),
                                     jnp.float32, -bound2, bound2)

        # ---- lane-dense padded / folded copies used by the kernel ----------
        hp = _round_up(hidden_dim, 128)
        op = _round_up(output_dim, 128)

        w1_p = jnp.pad(self.w1, ((0, 0), (0, hp - hidden_dim)))

        # Fold each (table, window position) into its W1 row slice:
        #   T[t, j] = table_padded @ W1[rows of position j]   -> [Vpad, Hp]
        # Done once at init at HIGHEST precision (exact f32), so the kernel's
        # one-hot matmul (a pure row selection) reproduces emb @ W1 exactly.
        folded = []
        self.pos_vpads = []
        foff = 0
        for tbl, win, edim in zip(self.emb_tables, self.window_sizes,
                                  self.emb_dims):
            vpad = _round_up(tbl.shape[0], 128)
            tbl_p = jnp.pad(tbl, ((0, vpad - tbl.shape[0]), (0, 0)))
            for _ in range(win):
                w1_slice = w1_p[foff:foff + edim, :]
                folded.append(jnp.dot(tbl_p, w1_slice,
                                      precision=jax.lax.Precision.HIGHEST))
                self.pos_vpads.append(vpad)
                foff += edim
        self.pos_offsets = []
        off = 0
        for vp in self.pos_vpads:
            self.pos_offsets.append(off)
            off += vp

        # TODO(synk): mxu_dtype=jnp.bfloat16 gives 3-6x MXU throughput on
        # v6e/v7x (one-hots are exact in bf16) but rounds the folded weights,
        # so it breaks the 1e-5 f32 parity check -> default stays f32.
        self.wfold = jnp.concatenate(folded, axis=0).astype(mxu_dtype)
        self.b1_p = jnp.pad(self.b1, ((0, 0), (0, hp - hidden_dim)))
        self.w2_p = jnp.pad(self.w2, ((0, hp - hidden_dim),
                                      (0, op - output_dim))).astype(mxu_dtype)
        self.b2_p = jnp.pad(self.b2, ((0, 0), (0, op - output_dim)))

    def __call__(self, features):
        # features: [B, sum(window_i)] int32
        B = features.shape[0]
        out = fused_window_mlp(features.astype(jnp.int32), self.wfold,
                               self.b1_p, self.w2_p, self.b2_p,
                               self.pos_vpads, self.pos_offsets)
        return out[:B, :self.output_dim]

    # Pure-JAX reference (mirrors the PyTorch forward) for correctness checks.
    def reference(self, features):
        batch_size = features.shape[0]
        pieces = []
        curr = 0
        for tbl, win, flat_len in zip(self.emb_tables, self.window_sizes,
                                      self.emb_len_list):
            idx = features[:, curr:curr + win]
            emb = jnp.take(tbl, idx, axis=0)
            pieces.append(emb.reshape(batch_size, flat_len))
            curr += win
        x = jnp.concatenate(pieces, axis=1)
        h = jnp.maximum(x @ self.w1 + self.b1, 0.0)
        return h @ self.w2 + self.b2


if __name__ == "__main__":
    key = jax.random.PRNGKey(0)
    k_model, k_words, k_tags = jax.random.split(key, 3)

    # (window size, vocab size, embedding dim) for words and tags.
    embedding_specs = [(3, 100, 16), (3, 20, 8)]
    hidden_dim, output_dim = 32, 10
    batch = 8

    model = FixedWindowModelPallas(embedding_specs, hidden_dim, output_dim,
                                   k_model)

    word_idx = jax.random.randint(k_words, (batch, 3), 0, 100, jnp.int32)
    tag_idx = jax.random.randint(k_tags, (batch, 3), 0, 20, jnp.int32)
    features = jnp.concatenate([word_idx, tag_idx], axis=1)     # [8, 6]

    out = jax.block_until_ready(model(features))
    ref = model.reference(features)

    assert out.shape == (batch, output_dim)
    assert jnp.allclose(out, ref, atol=1e-5, rtol=1e-5)
    print("KERNEL_OK")
</pallas_src>

<mosaic_0001>
module attributes {stable_mosaic.version = 11 : i64} {
  func.func @kernel(%arg0: i32, %arg1: memref<8x6xi32, #tpu.memory_space<vmem>>, %arg2: memref<768x128xf32, #tpu.memory_space<vmem>>, %arg3: memref<1x128xf32, #tpu.memory_space<vmem>>, %arg4: memref<128x128xf32, #tpu.memory_space<vmem>>, %arg5: memref<1x128xf32, #tpu.memory_space<vmem>>, %arg6: memref<8x128xf32, #tpu.memory_space<vmem>>, %arg7: memref<8x768xf32, #tpu.memory_space<vmem>>) attributes {dimension_semantics = [#tpu.dimension_semantics<parallel>], iteration_bounds = array<i64: 2>, scalar_prefetch = 0 : i64, scratch_operands = 1 : i64, tpu.core_type = #tpu.core_type<tc>, window_params = [{transform_indices = @transform_0, window_bounds = array<i64: 8, 6>}, {pipeline_mode = #tpu.pipeline_mode<synchronous>, transform_indices = @transform_1, window_bounds = array<i64: 768, 128>}, {pipeline_mode = #tpu.pipeline_mode<synchronous>, transform_indices = @transform_2, window_bounds = array<i64: 1, 128>}, {pipeline_mode = #tpu.pipeline_mode<synchronous>, transform_indices = @transform_3, window_bounds = array<i64: 128, 128>}, {pipeline_mode = #tpu.pipeline_mode<synchronous>, transform_indices = @transform_4, window_bounds = array<i64: 1, 128>}, {transform_indices = @transform_5, window_bounds = array<i64: 8, 128>}]} {
    %c0 = arith.constant 0 : index
    %c0_0 = arith.constant 0 : index
    %0 = vector.load %arg1[%c0, %c0_0] : memref<8x6xi32, #tpu.memory_space<vmem>>, vector<8x6xi32>
    %1 = tpu.iota {dimensions = array<i32: 1>} : vector<8x128xi32>
    %2 = vector.extract_strided_slice %0 {offsets = [0, 0], sizes = [8, 1], strides = [1, 1]} : vector<8x6xi32> to vector<8x1xi32>
    %3 = vector.broadcast %2 : vector<8x1xi32> to vector<8x128xi32>
    %4 = arith.cmpi eq, %1, %3 : vector<8x128xi32>
    %5 = arith.extui %4 : vector<8x128xi1> to vector<8x128xi32>
    %6 = arith.sitofp %5 : vector<8x128xi32> to vector<8x128xf32>
    %c0_1 = arith.constant 0 : index
    %c0_2 = arith.constant 0 : index
    %7 = vector.load %arg7[%c0_1, %c0_2] : memref<8x768xf32, #tpu.memory_space<vmem>>, vector<8x128xf32>
    tpu.vector_store %arg7[%c0_1, %c0_2], %6 {strides = array<i32>} : memref<8x768xf32, #tpu.memory_space<vmem>>, vector<8x128xf32>,
    %8 = vector.extract_strided_slice %0 {offsets = [0, 1], sizes = [8, 1], strides = [1, 1]} : vector<8x6xi32> to vector<8x1xi32>
    %9 = vector.broadcast %8 : vector<8x1xi32> to vector<8x128xi32>
    %10 = arith.cmpi eq, %1, %9 : vector<8x128xi32>
    %11 = arith.extui %10 : vector<8x128xi1> to vector<8x128xi32>
    %12 = arith.sitofp %11 : vector<8x128xi32> to vector<8x128xf32>
    %c0_3 = arith.constant 0 : index
    %c128 = arith.constant 128 : index
    %13 = vector.load %arg7[%c0_3, %c128] : memref<8x768xf32, #tpu.memory_space<vmem>>, vector<8x128xf32>
    tpu.vector_store %arg7[%c0_3, %c128], %12 {strides = array<i32>} : memref<8x768xf32, #tpu.memory_space<vmem>>, vector<8x128xf32>,
    %14 = vector.extract_strided_slice %0 {offsets = [0, 2], sizes = [8, 1], strides = [1, 1]} : vector<8x6xi32> to vector<8x1xi32>
    %15 = vector.broadcast %14 : vector<8x1xi32> to vector<8x128xi32>
    %16 = arith.cmpi eq, %1, %15 : vector<8x128xi32>
    %17 = arith.extui %16 : vector<8x128xi1> to vector<8x128xi32>
    %18 = arith.sitofp %17 : vector<8x128xi32> to vector<8x128xf32>
    %c0_4 = arith.constant 0 : index
    %c256 = arith.constant 256 : index
    %19 = vector.load %arg7[%c0_4, %c256] : memref<8x768xf32, #tpu.memory_space<vmem>>, vector<8x128xf32>
    tpu.vector_store %arg7[%c0_4, %c256], %18 {strides = array<i32>} : memref<8x768xf32, #tpu.memory_space<vmem>>, vector<8x128xf32>,
    %20 = vector.extract_strided_slice %0 {offsets = [0, 3], sizes = [8, 1], strides = [1, 1]} : vector<8x6xi32> to vector<8x1xi32>
    %21 = vector.broadcast %20 : vector<8x1xi32> to vector<8x128xi32>
    %22 = arith.cmpi eq, %1, %21 : vector<8x128xi32>
    %23 = arith.extui %22 : vector<8x128xi1> to vector<8x128xi32>
    %24 = arith.sitofp %23 : vector<8x128xi32> to vector<8x128xf32>
    %c0_5 = arith.constant 0 : index
    %c384 = arith.constant 384 : index
    %25 = vector.load %arg7[%c0_5, %c384] : memref<8x768xf32, #tpu.memory_space<vmem>>, vector<8x128xf32>
    tpu.vector_store %arg7[%c0_5, %c384], %24 {strides = array<i32>} : memref<8x768xf32, #tpu.memory_space<vmem>>, vector<8x128xf32>,
    %26 = vector.extract_strided_slice %0 {offsets = [0, 4], sizes = [8, 1], strides = [1, 1]} : vector<8x6xi32> to vector<8x1xi32>
    %27 = vector.broadcast %26 : vector<8x1xi32> to vector<8x128xi32>
    %28 = arith.cmpi eq, %1, %27 : vector<8x128xi32>
    %29 = arith.extui %28 : vector<8x128xi1> to vector<8x128xi32>
    %30 = arith.sitofp %29 : vector<8x128xi32> to vector<8x128xf32>
    %c0_6 = arith.constant 0 : index
    %c512 = arith.constant 512 : index
    %31 = vector.load %arg7[%c0_6, %c512] : memref<8x768xf32, #tpu.memory_space<vmem>>, vector<8x128xf32>
    tpu.vector_store %arg7[%c0_6, %c512], %30 {strides = array<i32>} : memref<8x768xf32, #tpu.memory_space<vmem>>, vector<8x128xf32>,
    %32 = vector.extract_strided_slice %0 {offsets = [0, 5], sizes = [8, 1], strides = [1, 1]} : vector<8x6xi32> to vector<8x1xi32>
    %33 = vector.broadcast %32 : vector<8x1xi32> to vector<8x128xi32>
    %34 = arith.cmpi eq, %1, %33 : vector<8x128xi32>
    %35 = arith.extui %34 : vector<8x128xi1> to vector<8x128xi32>
    %36 = arith.sitofp %35 : vector<8x128xi32> to vector<8x128xf32>
    %c0_7 = arith.constant 0 : index
    %c640 = arith.constant 640 : index
    %37 = vector.load %arg7[%c0_7, %c640] : memref<8x768xf32, #tpu.memory_space<vmem>>, vector<8x128xf32>
    tpu.vector_store %arg7[%c0_7, %c640], %36 {strides = array<i32>} : memref<8x768xf32, #tpu.memory_space<vmem>>, vector<8x128xf32>,
    %c0_8 = arith.constant 0 : index
    %c0_9 = arith.constant 0 : index
    %38 = vector.load %arg7[%c0_8, %c0_9] : memref<8x768xf32, #tpu.memory_space<vmem>>, vector<8x768xf32>
    %c0_10 = arith.constant 0 : index
    %c0_11 = arith.constant 0 : index
    %39 = vector.load %arg2[%c0_10, %c0_11] : memref<768x128xf32, #tpu.memory_space<vmem>>, vector<768x128xf32>
    %cst = arith.constant dense<0.000000e+00> : vector<8x128xf32>
    %40 = tpu.matmul %38, %39, %cst {dimension_numbers = #tpu.dot_dimension_numbers<[1], [0], [0], [1], [0, 0, 1, 1], [], []>} : vector<8x768xf32>, vector<768x128xf32>, vector<8x128xf32> -> vector<8x128xf32>
    %c0_12 = arith.constant 0 : index
    %c0_13 = arith.constant 0 : index
    %41 = vector.load %arg3[%c0_12, %c0_13] : memref<1x128xf32, #tpu.memory_space<vmem>>, vector<1x128xf32>
    %42 = vector.broadcast %41 : vector<1x128xf32> to vector<8x128xf32>
    %43 = arith.addf %40, %42 : vector<8x128xf32>
    %cst_14 = arith.constant 0.000000e+00 : f32
    %44 = vector.broadcast %cst_14 : f32 to vector<8x128xf32>
    %45 = arith.maximumf %43, %44 : vector<8x128xf32>
    %c0_15 = arith.constant 0 : index
    %c0_16 = arith.constant 0 : index
    %46 = vector.load %arg4[%c0_15, %c0_16] : memref<128x128xf32, #tpu.memory_space<vmem>>, vector<128x128xf32>
    %cst_17 = arith.constant dense<0.000000e+00> : vector<8x128xf32>
    %47 = tpu.matmul %45, %46, %cst_17 {dimension_numbers = #tpu.dot_dimension_numbers<[1], [0], [0], [1], [0, 0, 1, 1], [], []>} : vector<8x128xf32>, vector<128x128xf32>, vector<8x128xf32> -> vector<8x128xf32>
    %c0_18 = arith.constant 0 : index
    %c0_19 = arith.constant 0 : index
    %48 = vector.load %arg5[%c0_18, %c0_19] : memref<1x128xf32, #tpu.memory_space<vmem>>, vector<1x128xf32>
    %49 = vector.broadcast %48 : vector<1x128xf32> to vector<8x128xf32>
    %50 = arith.addf %47, %49 : vector<8x128xf32>
    %c0_20 = arith.constant 0 : index
    %c0_21 = arith.constant 0 : index
    %51 = vector.load %arg6[%c0_20, %c0_21] : memref<8x128xf32, #tpu.memory_space<vmem>>, vector<8x128xf32>
    tpu.vector_store %arg6[%c0_20, %c0_21], %50 {strides = array<i32>} : memref<8x128xf32, #tpu.memory_space<vmem>>, vector<8x128xf32>,
    return
  }
  func.func @transform_0(%arg0: i32) -> (i32, i32) {
    %c0_i32 = arith.constant 0 : i32
    %c0_i32_0 = arith.constant 0 : i32
    return %arg0, %c0_i32 : i32, i32
  }
  func.func @transform_1(%arg0: i32) -> (i32, i32) {
    %c0_i32 = arith.constant 0 : i32
    %c0_i32_0 = arith.constant 0 : i32
    %c0_i32_1 = arith.constant 0 : i32
    return %c0_i32, %c0_i32_0 : i32, i32
  }
  func.func @transform_2(%arg0: i32) -> (i32, i32) {
    %c0_i32 = arith.constant 0 : i32
    %c0_i32_0 = arith.constant 0 : i32
    %c0_i32_1 = arith.constant 0 : i32
    return %c0_i32, %c0_i32_0 : i32, i32
  }
  func.func @transform_3(%arg0: i32) -> (i32, i32) {
    %c0_i32 = arith.constant 0 : i32
    %c0_i32_0 = arith.constant 0 : i32
    %c0_i32_1 = arith.constant 0 : i32
    return %c0_i32, %c0_i32_0 : i32, i32
  }
  func.func @transform_4(%arg0: i32) -> (i32, i32) {
    %c0_i32 = arith.constant 0 : i32
    %c0_i32_0 = arith.constant 0 : i32
    %c0_i32_1 = arith.constant 0 : i32
    return %c0_i32, %c0_i32_0 : i32, i32
  }
  func.func @transform_5(%arg0: i32) -> (i32, i32) {
    %c0_i32 = arith.constant 0 : i32
    %c0_i32_0 = arith.constant 0 : i32
    return %arg0, %c0_i32 : i32, i32
  }
}

</mosaic_0001>

<llo_original>
// kernel: tpu_custom_call.1
$region0: #{tpu_custom_call.1}
  #allocation0 [shape = 'u32[]', space=smem, size = 0x4, offset = 0x4, fixed_abs, tag = 'smem constant byte address 0x4 - core index']
  #allocation1 [shape = 'u32[144,128]{1,0:T(1,128)}', space=vmem, size = 0x12000, scoped, tag = 'internal scratch']
  #allocation2 [shape = 'f32[8,768]{1,0:T(8,128)}', space=vmem, size = 0x6000, scoped, tag = 'scratch operand']
  %s0 = inlined_call_operand.vmem [shape: s32[16,6], index: 0, kind: input, shape index: {}]
  %s1 = inlined_call_operand.hbm [shape: f32[768,128], index: 1, kind: input, shape index: {}]
  %s2 = inlined_call_operand.vmem [shape: f32[1,128], index: 2, kind: input, shape index: {}]
  %s3 = inlined_call_operand.hbm [shape: f32[128,128], index: 3, kind: input, shape index: {}]
  %s4 = inlined_call_operand.vmem [shape: f32[1,128], index: 4, kind: input, shape index: {}]
  %s5 = inlined_call_operand.hbm [shape: f32[16,128], index: 5, kind: output, shape index: {}]
  %s6 = sld [smem:[#allocation0]]
  $region61: #{tpu_custom_call.1} parent=0
    _
  %s8 = ssub.s32 1, %s6
  %s9 = scalar_select 0, %s8, %s6
  $region1: #{tpu_custom_call.1} parent=0
    #allocation3 [shape = 'u8[393216]{0}', space=vmem, size = 0x60000, scoped, tag = 'input window, operand 1, single buffered']
    #allocation4 [shape = 's32[2]{0}', space=sflag, size = 0x8, scoped, tag = 'scoped memory for tpu_custom_call.1']
    #allocation5 [shape = 's32[2]{0}', space=sflag, size = 0x8, scoped, tag = 'scoped memory for tpu_custom_call.1']
    #allocation6 [shape = 'u8[65536]{0}', space=vmem, size = 0x10000, scoped, tag = 'input window, operand 3, single buffered']
    #allocation7 [shape = 's32[1]{0}', space=sflag, size = 0x4, scoped, tag = 'scoped memory for tpu_custom_call.1']
    #allocation8 [shape = 'u8[8192]{0}', space=vmem, size = 0x2000, scoped, tag = 'output window, operand 0']
    %10 = vsyncpa [#allocation4], 0
    %11 = vsyncpa [#allocation7], 0
    %12 = vsyncpa [#allocation5], 0
    %s13 = scalar_lea.sflag [#allocation5], 1
    %14 = vsyncpa %s13, 0
    loop: start=0, step=1, limit=4
    $region2: #{tpu_custom_call.1} parent=1 // loop_pre_header
      _
    $region3: #{tpu_custom_call.1} parent=1 // loop_header
      %s16 = sphi 0, %s20
      %p17 = scmp.ge.s32.totalorder %s16, 4
      %s26 = sphi 0, %s28
      %s29 = sphi 0, %s26
      %s30 = sphi 0, %s29
      %s46 = sphi 0, %s30
      %s50 = sphi 0, %s50
      %s52 = sphi 0, %s50
      %s53 = sphi 0, %s52
      %s67 = sphi 0, %s53
      %s71 = sphi 0, %s71
      %s73 = sphi 0, %s71
      %s74 = sphi 0, %s73
      %s88 = sphi 0, %s74
      %s92 = sphi 0, %s92
      %s94 = sphi 0, %s92
      %s95 = sphi 0, %s94
      %s109 = sphi 0, %s95
      %s113 = sphi 0, %s113
      %s115 = sphi 0, %s113
      %s116 = sphi 0, %s115
      %s130 = sphi 0, %s116
      %s136 = sphi 0, %s138
      %s139 = sphi 0, %s136
      %s140 = sphi 0, %s139
      %s156 = sphi 0, %s140
    $region4: #{tpu_custom_call.1} parent=1 // loop_header_branch
      %19 = sbr.rel (%p17) target = $region8
    $region5: #{tpu_custom_call.1} parent=1 // loop_body
      %s21 = ssub.s32 %s16, 1
      %s22 = ssub.s32 %s16, 2
      %s23 = sadd.s32 %s16, 1
      %s24 = ssub.s32 %s16, %s23
      %p25 = scmp.eq.s32.totalorder %s24, 0
      %s27 = sadd.s32 %s26, 1
      %s28 = scalar_select %p25, %s26, %s27
      %p31 = pneg %p25
      %p32 = scmp.eq.s32.totalorder %s16, 1
      %p33 = por %p31, %p32
      %p34 = scmp.ne.s32.totalorder %s26, %s29
      %p35 = scmp.eq.s32.totalorder %s16, 0
      %p36 = por %p34, %p35
      %p37 = scmp.ne.s32.totalorder %s26, %s29
      %p38 = scmp.eq.s32.totalorder %s21, 1
      %p39 = por %p37, %p38
      %p40 = scmp.ne.s32.totalorder %s29, %s30
      %p41 = scmp.eq.s32.totalorder %s21, 0
      %p42 = por %p40, %p41
      %p43 = scmp.ne.s32.totalorder %s29, %s30
      %p44 = scmp.eq.s32.totalorder %s22, 1
      %p45 = por %p43, %p44
      %p47 = scmp.ne.s32.totalorder %s30, %s46
      %p48 = scmp.eq.s32.totalorder %s22, 0
      %p49 = por %p47, %p48
      %s51 = sadd.s32 %s50, 1
      %p54 = scmp.eq.s32.totalorder %s16, 1
      %p55 = scmp.ne.s32.totalorder %s50, %s52
      %p56 = scmp.eq.s32.totalorder %s16, 0
      %p57 = por %p55, %p56
      %p58 = scmp.ne.s32.totalorder %s50, %s52
      %p59 = scmp.eq.s32.totalorder %s21, 1
      %p60 = por %p58, %p59
      %p61 = scmp.ne.s32.totalorder %s52, %s53
      %p62 = scmp.eq.s32.totalorder %s21, 0
      %p63 = por %p61, %p62
      %p64 = scmp.ne.s32.totalorder %s52, %s53
      %p65 = scmp.eq.s32.totalorder %s22, 1
      %p66 = por %p64, %p65
      %p68 = scmp.ne.s32.totalorder %s53, %s67
      %p69 = scmp.eq.s32.totalorder %s22, 0
      %p70 = por %p68, %p69
      %s72 = sadd.s32 %s71, 1
      %p75 = scmp.eq.s32.totalorder %s16, 1
      %p76 = scmp.ne.s32.totalorder %s71, %s73
      %p77 = scmp.eq.s32.totalorder %s16, 0
      %p78 = por %p76, %p77
      %p79 = scmp.ne.s32.totalorder %s71, %s73
      %p80 = scmp.eq.s32.totalorder %s21, 1
      %p81 = por %p79, %p80
      %p82 = scmp.ne.s32.totalorder %s73, %s74
      %p83 = scmp.eq.s32.totalorder %s21, 0
      %p84 = por %p82, %p83
      %p85 = scmp.ne.s32.totalorder %s73, %s74
      %p86 = scmp.eq.s32.totalorder %s22, 1
      %p87 = por %p85, %p86
      %p89 = scmp.ne.s32.totalorder %s74, %s88
      %p90 = scmp.eq.s32.totalorder %s22, 0
      %p91 = por %p89, %p90
      %s93 = sadd.s32 %s92, 1
      %p96 = scmp.eq.s32.totalorder %s16, 1
      %p97 = scmp.ne.s32.totalorder %s92, %s94
      %p98 = scmp.eq.s32.totalorder %s16, 0
      %p99 = por %p97, %p98
      %p100 = scmp.ne.s32.totalorder %s92, %s94
      %p101 = scmp.eq.s32.totalorder %s21, 1
      %p102 = por %p100, %p101
      %p103 = scmp.ne.s32.totalorder %s94, %s95
      %p104 = scmp.eq.s32.totalorder %s21, 0
      %p105 = por %p103, %p104
      %p106 = scmp.ne.s32.totalorder %s94, %s95
      %p107 = scmp.eq.s32.totalorder %s22, 1
      %p108 = por %p106, %p107
      %p110 = scmp.ne.s32.totalorder %s95, %s109
      %p111 = scmp.eq.s32.totalorder %s22, 0
      %p112 = por %p110, %p111
      %s114 = sadd.s32 %s113, 1
      %p117 = scmp.eq.s32.totalorder %s16, 1
      %p118 = scmp.ne.s32.totalorder %s113, %s115
      %p119 = scmp.eq.s32.totalorder %s16, 0
      %p120 = por %p118, %p119
      %p121 = scmp.ne.s32.totalorder %s113, %s115
      %p122 = scmp.eq.s32.totalorder %s21, 1
      %p123 = por %p121, %p122
      %p124 = scmp.ne.s32.totalorder %s115, %s116
      %p125 = scmp.eq.s32.totalorder %s21, 0
      %p126 = por %p124, %p125
      %p127 = scmp.ne.s32.totalorder %s115, %s116
      %p128 = scmp.eq.s32.totalorder %s22, 1
      %p129 = por %p127, %p128
      %p131 = scmp.ne.s32.totalorder %s116, %s130
      %p132 = scmp.eq.s32.totalorder %s22, 0
      %p133 = por %p131, %p132
      %s134 = ssub.s32 %s16, %s23
      %p135 = scmp.eq.s32.totalorder %s134, 0
      %s137 = sadd.s32 %s136, 1
      %s138 = scalar_select %p135, %s136, %s137
      %p141 = pneg %p135
      %p142 = scmp.eq.s32.totalorder %s16, 1
      %p143 = por %p141, %p142
      %p144 = scmp.ne.s32.totalorder %s136, %s139
      %p145 = scmp.eq.s32.totalorder %s16, 0
      %p146 = por %p144, %p145
      %p147 = scmp.ne.s32.totalorder %s136, %s139
      %p148 = scmp.eq.s32.totalorder %s21, 1
      %p149 = por %p147, %p148
      %p150 = scmp.ne.s32.totalorder %s139, %s140
      %p151 = scmp.eq.s32.totalorder %s21, 0
      %p152 = por %p150, %p151
      %p153 = scmp.ne.s32.totalorder %s139, %s140
      %p154 = scmp.eq.s32.totalorder %s22, 1
      %p155 = por %p153, %p154
      %p157 = scmp.ne.s32.totalorder %s140, %s156
      %p158 = scmp.eq.s32.totalorder %s22, 0
      %p159 = por %p157, %p158
      %p160 = scmp.le.s32.totalorder 1, %s16
      %p161 = scmp.lt.s32.totalorder %s16, 3
      %p162 = pnand %p160, %p161
      %p163 = pneg %p162
      // Predicated region
      $region9: #{tpu_custom_call.1} parent=5 // pred_check
        _
      $region10: #{tpu_custom_call.1} parent=5 // pred_check_branch
        %165 = sbr.rel (%p162) target = $region12
      $region11: #{tpu_custom_call.1} parent=5 // pred_region
        %s166 = ssub.s32 %s16, 1
        // Predicated region
        $region13: #{tpu_custom_call.1} parent=11 // pred_check
          %p167 = pneg %p63
        $region14: #{tpu_custom_call.1} parent=11 // pred_check_branch
          %169 = sbr.rel (%p167) target = $region16
        $region15: #{tpu_custom_call.1} parent=11 // pred_region
          %s171 = ssub.s32 12288, 12288
          %172 = vsyncadd [#allocation4], %s171
          %s173 = sshll.u32 [#allocation3], 4
          %s174 = int_to_ptr.vmem [resolvable:$true] %s173
          %179 = dma.hbm_to_vmem [thread:$0]  %s1, 12288, %s174, [#allocation4], 128, 128, 8
        $region16: #{tpu_custom_call.1} parent=11 // pred_fallthru
          _
        // Predicated region
        $region17: #{tpu_custom_call.1} parent=11 // pred_check
          %p180 = pneg %p84
        $region18: #{tpu_custom_call.1} parent=11 // pred_check_branch
          %182 = sbr.rel (%p180) target = $region20
        $region19: #{tpu_custom_call.1} parent=11 // pred_region
          _
        $region20: #{tpu_custom_call.1} parent=11 // pred_fallthru
          _
        // Predicated region
        $region21: #{tpu_custom_call.1} parent=11 // pred_check
          %p183 = pneg %p105
        $region22: #{tpu_custom_call.1} parent=11 // pred_check_branch
          %185 = sbr.rel (%p183) target = $region24
        $region23: #{tpu_custom_call.1} parent=11 // pred_region
          %s187 = ssub.s32 2048, 2048
          %188 = vsyncadd [#allocation7], %s187
          %s189 = sshll.u32 [#allocation6], 4
          %s190 = int_to_ptr.vmem [resolvable:$true] %s189
          %195 = dma.hbm_to_vmem [thread:$0]  %s3, 2048, %s190, [#allocation7], 128, 128, 8
        $region24: #{tpu_custom_call.1} parent=11 // pred_fallthru
          _
        // Predicated region
        $region25: #{tpu_custom_call.1} parent=11 // pred_check
          %p196 = pneg %p126
        $region26: #{tpu_custom_call.1} parent=11 // pred_check_branch
          %198 = sbr.rel (%p196) target = $region28
        $region27: #{tpu_custom_call.1} parent=11 // pred_region
          _
        $region28: #{tpu_custom_call.1} parent=11 // pred_fallthru
          _
      $region12: #{tpu_custom_call.1} parent=5 // pred_fallthru
        _
      %p199 = scmp.lt.s32.totalorder %s16, 2
      // Predicated region
      $region29: #{tpu_custom_call.1} parent=5 // pred_check
        %p200 = pneg %p199
      $region30: #{tpu_custom_call.1} parent=5 // pred_check_branch
        %202 = sbr.rel (%p200) target = $region32
      $region31: #{tpu_custom_call.1} parent=5 // pred_region
        // Predicated region
        $region33: #{tpu_custom_call.1} parent=31 // pred_check
          %p203 = pneg %p36
        $region34: #{tpu_custom_call.1} parent=31 // pred_check_branch
          %205 = sbr.rel (%p203) target = $region36
        $region35: #{tpu_custom_call.1} parent=31 // pred_region
          %p206 = scmp.lt.s32.totalorder %s16, 1
          %s207 = scalar_select %p206, %s16, 1
          %s208 = smul.addr %s207, 8
          %s209 = scalar_lea.vmem %s0, %s208
        $region36: #{tpu_custom_call.1} parent=31 // pred_fallthru
          _
      $region32: #{tpu_custom_call.1} parent=5 // pred_fallthru
        _
      %p210 = scmp.le.s32.totalorder 1, %s16
      %p211 = scmp.lt.s32.totalorder %s16, 3
      %p212 = pnand %p210, %p211
      %p213 = pneg %p212
      // Predicated region
      $region37: #{tpu_custom_call.1} parent=5 // pred_check
        _
      $region38: #{tpu_custom_call.1} parent=5 // pred_check_branch
        %215 = sbr.rel (%p212) target = $region40
      $region39: #{tpu_custom_call.1} parent=5 // pred_region
        %s216 = ssub.s32 %s16, 1
        // Predicated region
        $region41: #{tpu_custom_call.1} parent=39 // pred_check
          %p217 = pneg %p63
        $region42: #{tpu_custom_call.1} parent=39 // pred_check_branch
          %219 = sbr.rel (%p217) target = $region44
        $region43: #{tpu_custom_call.1} parent=39 // pred_region
          %220 = dma.done [#allocation4], 12288
        $region44: #{tpu_custom_call.1} parent=39 // pred_fallthru
          _
        // Predicated region
        $region45: #{tpu_custom_call.1} parent=39 // pred_check
          %p221 = pneg %p105
        $region46: #{tpu_custom_call.1} parent=39 // pred_check_branch
          %223 = sbr.rel (%p221) target = $region48
        $region47: #{tpu_custom_call.1} parent=39 // pred_region
          %224 = dma.done [#allocation7], 2048
        $region48: #{tpu_custom_call.1} parent=39 // pred_fallthru
          _
        %p225 = scmp.lt.s32.totalorder %s21, 1
        %s226 = scalar_select %p225, %s21, 1
        %s227 = smul.addr %s226, 8
        %s228 = scalar_lea.vmem %s0, %s227
        %p229 = pneg %p42
        %p230 = pneg %p39
        %p231 = pneg %p63
        %p232 = pneg %p60
        %p233 = pneg %p84
        %p234 = pneg %p81
        %p235 = pneg %p105
        %p236 = pneg %p102
        %p237 = pneg %p126
        %p238 = pneg %p123
        %p239 = pneg %p152
        %p240 = pneg %p149
        %s241 = sand.u32 %s139, 1
        %s242 = scalar_lea.sflag [#allocation5], %s241
        %s243 = sand.u32 %s139, 1
        %s244 = smul.addr %s243, 8
        %s245 = scalar_lea.vmem [#allocation8], %s244
        %p246 = scmp.lt.s32.totalorder %s21, 1
        %s247 = scalar_select %p246, %s21, 1
        %s248 = smul.addr %s247, 8
        %s249 = scalar_lea.vmem %s0, %s248
        %v250 = vld [vmem:[%s249] sm:$0xff]
        %v251 = vlaneseq
        %v252 = vand.u32 %v251, 127
        %253 = vset.pattern.permute.xlu0 0
        %254 = vperm.xlu0 %253, %v250
        %v255 = vpop.permute.xlu0 %254
        %vm256 = vcmp.eq.s32.totalorder %v252, %v255
        %v257 = vsel %vm256, 1, 0
        %v258 = vcvt.s32.f32 %v257
        %259 = vst [vmem:[#allocation2] sm:$0xff] %v258
        %260 = vset.pattern.permute.xlu0 1
        %261 = vperm.xlu0 %260, %v250
        %v262 = vpop.permute.xlu0 %261
        %vm263 = vcmp.eq.s32.totalorder %v252, %v262
        %v264 = vsel %vm263, 1, 0
        %v265 = vcvt.s32.f32 %v264
        %266 = vst [vmem:[#allocation2 + $0x8] sm:$0xff] %v265
        %267 = vset.pattern.permute.xlu0 2
        %268 = vperm.xlu0 %267, %v250
        %v269 = vpop.permute.xlu0 %268
        %vm270 = vcmp.eq.s32.totalorder %v252, %v269
        %v271 = vsel %vm270, 1, 0
        %v272 = vcvt.s32.f32 %v271
        %273 = vst [vmem:[#allocation2 + $0x10] sm:$0xff] %v272
        %274 = vset.pattern.permute.xlu0 3
        %275 = vperm.xlu0 %274, %v250
        %v276 = vpop.permute.xlu0 %275
        %vm277 = vcmp.eq.s32.totalorder %v252, %v276
        %v278 = vsel %vm277, 1, 0
        %v279 = vcvt.s32.f32 %v278
        %280 = vst [vmem:[#allocation2 + $0x18] sm:$0xff] %v279
        %281 = vset.pattern.permute.xlu0 4
        %282 = vperm.xlu0 %281, %v250
        %v283 = vpop.permute.xlu0 %282
        %vm284 = vcmp.eq.s32.totalorder %v252, %v283
        %v285 = vsel %vm284, 1, 0
        %v286 = vcvt.s32.f32 %v285
        %287 = vst [vmem:[#allocation2 + $0x20] sm:$0xff] %v286
        %288 = vset.pattern.permute.xlu0 5
        %289 = vperm.xlu0 %288, %v250
        %v290 = vpop.permute.xlu0 %289
        %vm291 = vcmp.eq.s32.totalorder %v252, %v290
        %v292 = vsel %vm291, 1, 0
        %v293 = vcvt.s32.f32 %v292
        %294 = vst [vmem:[#allocation2 + $0x28] sm:$0xff] %v293
        %v295 = vld [vmem:[#allocation2] sm:$0xff]
        %v296 = vld [vmem:[#allocation2 + $0x8] sm:$0xff]
        %v297 = vld [vmem:[#allocation2 + $0x10] sm:$0xff]
        %v298 = vld [vmem:[#allocation2 + $0x18] sm:$0xff]
        %v299 = vld [vmem:[#allocation2 + $0x20] sm:$0xff]
        %v300 = vld [vmem:[#allocation2 + $0x28] sm:$0xff]
        %v301 = vld [vmem:[#allocation3] sm:$0xff]
        %v302 = vld [vmem:[#allocation3 + $0x8] sm:$0xff]
        %v303 = vld [vmem:[#allocation3 + $0x10] sm:$0xff]
        %v304 = vld [vmem:[#allocation3 + $0x18] sm:$0xff]
        %v305 = vld [vmem:[#allocation3 + $0x20] sm:$0xff]
        %v306 = vld [vmem:[#allocation3 + $0x28] sm:$0xff]
        %v307 = vld [vmem:[#allocation3 + $0x30] sm:$0xff]
        %v308 = vld [vmem:[#allocation3 + $0x38] sm:$0xff]
        %v309 = vld [vmem:[#allocation3 + $0x40] sm:$0xff]
        %v310 = vld [vmem:[#allocation3 + $0x48] sm:$0xff]
        %v311 = vld [vmem:[#allocation3 + $0x50] sm:$0xff]
        %v312 = vld [vmem:[#allocation3 + $0x58] sm:$0xff]
        %v313 = vld [vmem:[#allocation3 + $0x60] sm:$0xff]
        %v314 = vld [vmem:[#allocation3 + $0x68] sm:$0xff]
        %v315 = vld [vmem:[#allocation3 + $0x70] sm:$0xff]
        %v316 = vld [vmem:[#allocation3 + $0x78] sm:$0xff]
        %v317 = vld [vmem:[#allocation3 + $0x80] sm:$0xff]
        %v318 = vld [vmem:[#allocation3 + $0x88] sm:$0xff]
        %v319 = vld [vmem:[#allocation3 + $0x90] sm:$0xff]
        %v320 = vld [vmem:[#allocation3 + $0x98] sm:$0xff]
        %v321 = vld [vmem:[#allocation3 + $0xa0] sm:$0xff]
        %v322 = vld [vmem:[#allocation3 + $0xa8] sm:$0xff]
        %v323 = vld [vmem:[#allocation3 + $0xb0] sm:$0xff]
        %v324 = vld [vmem:[#allocation3 + $0xb8] sm:$0xff]
        %v325 = vld [vmem:[#allocation3 + $0xc0] sm:$0xff]
        %v326 = vld [vmem:[#allocation3 + $0xc8] sm:$0xff]
        %v327 = vld [vmem:[#allocation3 + $0xd0] sm:$0xff]
        %v328 = vld [vmem:[#allocation3 + $0xd8] sm:$0xff]
        %v329 = vld [vmem:[#allocation3 + $0xe0] sm:$0xff]
        %v330 = vld [vmem:[#allocation3 + $0xe8] sm:$0xff]
        %v331 = vld [vmem:[#allocation3 + $0xf0] sm:$0xff]
        %v332 = vld [vmem:[#allocation3 + $0xf8] sm:$0xff]
        %v333 = vld [vmem:[#allocation3 + $0x100] sm:$0xff]
        %v334 = vld [vmem:[#allocation3 + $0x108] sm:$0xff]
        %v335 = vld [vmem:[#allocation3 + $0x110] sm:$0xff]
        %v336 = vld [vmem:[#allocation3 + $0x118] sm:$0xff]
        %v337 = vld [vmem:[#allocation3 + $0x120] sm:$0xff]
        %v338 = vld [vmem:[#allocation3 + $0x128] sm:$0xff]
        %v339 = vld [vmem:[#allocation3 + $0x130] sm:$0xff]
        %v340 = vld [vmem:[#allocation3 + $0x138] sm:$0xff]
        %v341 = vld [vmem:[#allocation3 + $0x140] sm:$0xff]
        %v342 = vld [vmem:[#allocation3 + $0x148] sm:$0xff]
        %v343 = vld [vmem:[#allocation3 + $0x150] sm:$0xff]
        %v344 = vld [vmem:[#allocation3 + $0x158] sm:$0xff]
        %v345 = vld [vmem:[#allocation3 + $0x160] sm:$0xff]
        %v346 = vld [vmem:[#allocation3 + $0x168] sm:$0xff]
        %v347 = vld [vmem:[#allocation3 + $0x170] sm:$0xff]
        %v348 = vld [vmem:[#allocation3 + $0x178] sm:$0xff]
        %v349 = vld [vmem:[#allocation3 + $0x180] sm:$0xff]
        %v350 = vld [vmem:[#allocation3 + $0x188] sm:$0xff]
        %v351 = vld [vmem:[#allocation3 + $0x190] sm:$0xff]
        %v352 = vld [vmem:[#allocation3 + $0x198] sm:$0xff]
        %v353 = vld [vmem:[#allocation3 + $0x1a0] sm:$0xff]
        %v354 = vld [vmem:[#allocation3 + $0x1a8] sm:$0xff]
        %v355 = vld [vmem:[#allocation3 + $0x1b0] sm:$0xff]
        %v356 = vld [vmem:[#allocation3 + $0x1b8] sm:$0xff]
        %v357 = vld [vmem:[#allocation3 + $0x1c0] sm:$0xff]
        %v358 = vld [vmem:[#allocation3 + $0x1c8] sm:$0xff]
        %v359 = vld [vmem:[#allocation3 + $0x1d0] sm:$0xff]
        %v360 = vld [vmem:[#allocation3 + $0x1d8] sm:$0xff]
        %v361 = vld [vmem:[#allocation3 + $0x1e0] sm:$0xff]
        %v362 = vld [vmem:[#allocation3 + $0x1e8] sm:$0xff]
        %v363 = vld [vmem:[#allocation3 + $0x1f0] sm:$0xff]
        %v364 = vld [vmem:[#allocation3 + $0x1f8] sm:$0xff]
        %v365 = vld [vmem:[#allocation3 + $0x200] sm:$0xff]
        %v366 = vld [vmem:[#allocation3 + $0x208] sm:$0xff]
        %v367 = vld [vmem:[#allocation3 + $0x210] sm:$0xff]
        %v368 = vld [vmem:[#allocation3 + $0x218] sm:$0xff]
        %v369 = vld [vmem:[#allocation3 + $0x220] sm:$0xff]
        %v370 = vld [vmem:[#allocation3 + $0x228] sm:$0xff]
        %v371 = vld [vmem:[#allocation3 + $0x230] sm:$0xff]
        %v372 = vld [vmem:[#allocation3 + $0x238] sm:$0xff]
        %v373 = vld [vmem:[#allocation3 + $0x240] sm:$0xff]
        %v374 = vld [vmem:[#allocation3 + $0x248] sm:$0xff]
        %v375 = vld [vmem:[#allocation3 + $0x250] sm:$0xff]
        %v376 = vld [vmem:[#allocation3 + $0x258] sm:$0xff]
        %v377 = vld [vmem:[#allocation3 + $0x260] sm:$0xff]
        %v378 = vld [vmem:[#allocation3 + $0x268] sm:$0xff]
        %v379 = vld [vmem:[#allocation3 + $0x270] sm:$0xff]
        %v380 = vld [vmem:[#allocation3 + $0x278] sm:$0xff]
        %v381 = vld [vmem:[#allocation3 + $0x280] sm:$0xff]
        %v382 = vld [vmem:[#allocation3 + $0x288] sm:$0xff]
        %v383 = vld [vmem:[#allocation3 + $0x290] sm:$0xff]
        %v384 = vld [vmem:[#allocation3 + $0x298] sm:$0xff]
        %v385 = vld [vmem:[#allocation3 + $0x2a0] sm:$0xff]
        %v386 = vld [vmem:[#allocation3 + $0x2a8] sm:$0xff]
        %v387 = vld [vmem:[#allocation3 + $0x2b0] sm:$0xff]
        %v388 = vld [vmem:[#allocation3 + $0x2b8] sm:$0xff]
        %v389 = vld [vmem:[#allocation3 + $0x2c0] sm:$0xff]
        %v390 = vld [vmem:[#allocation3 + $0x2c8] sm:$0xff]
        %v391 = vld [vmem:[#allocation3 + $0x2d0] sm:$0xff]
        %v392 = vld [vmem:[#allocation3 + $0x2d8] sm:$0xff]
        %v393 = vld [vmem:[#allocation3 + $0x2e0] sm:$0xff]
        %v394 = vld [vmem:[#allocation3 + $0x2e8] sm:$0xff]
        %v395 = vld [vmem:[#allocation3 + $0x2f0] sm:$0xff]
        %v396 = vld [vmem:[#allocation3 + $0x2f8] sm:$0xff]
        %v397 = vld [vmem:[%s2] sm:$0x1]
        %v399 = vlaneseq
        %v400 = vshrl.u32 %v399, 7
        %v401 = vsub.s32 0, %v400
        %v402 = vrot.slane %v397, %v401
        %404 = vmatprep.subr.mxu0 0.0
        %405 = vmatpush1.msra.mxu0 %v301
        %406 = vmatprep.subr.mxu0 0.0
        %407 = vmatpush1.msra.mxu0 %v302
        %408 = vmatprep.subr.mxu0 0.0
        %409 = vmatpush1.msra.mxu0 %v303
        %410 = vmatprep.subr.mxu0 0.0
        %411 = vmatpush1.msra.mxu0 %v304
        %412 = vmatprep.subr.mxu0 0.0
        %413 = vmatpush1.msra.mxu0 %v305
        %414 = vmatprep.subr.mxu0 0.0
        %415 = vmatpush1.msra.mxu0 %v306
        %416 = vmatprep.subr.mxu0 0.0
        %417 = vmatpush1.msra.mxu0 %v307
        %418 = vmatprep.subr.mxu0 0.0
        %419 = vmatpush1.msra.mxu0 %v308
        %420 = vmatprep.subr.mxu0 0.0
        %421 = vmatpush1.msra.mxu0 %v309
        %422 = vmatprep.subr.mxu0 0.0
        %423 = vmatpush1.msra.mxu0 %v310
        %424 = vmatprep.subr.mxu0 0.0
        %425 = vmatpush1.msra.mxu0 %v311
        %426 = vmatprep.subr.mxu0 0.0
        %427 = vmatpush1.msra.mxu0 %v312
        %428 = vmatprep.subr.mxu0 0.0
        %429 = vmatpush1.msra.mxu0 %v313
        %430 = vmatprep.subr.mxu0 0.0
        %431 = vmatpush1.msra.mxu0 %v314
        %432 = vmatprep.subr.mxu0 0.0
        %433 = vmatpush1.msra.mxu0 %v315
        %434 = vmatprep.subr.mxu0 0.0
        %435 = vmatpush1.msra.mxu0 %v316
        %436 = vmatprep.subr.mxu0 0.0
        %437 = vmatpush1.msra.mxu0 %v317
        %438 = vmatprep.subr.mxu0 0.0
        %439 = vmatpush1.msra.mxu0 %v318
        %440 = vmatprep.subr.mxu0 0.0
        %441 = vmatpush1.msra.mxu0 %v319
        %442 = vmatprep.subr.mxu0 0.0
        %443 = vmatpush1.msra.mxu0 %v320
        %444 = vmatprep.subr.mxu0 0.0
        %445 = vmatpush1.msra.mxu0 %v321
        %446 = vmatprep.subr.mxu0 0.0
        %447 = vmatpush1.msra.mxu0 %v322
        %448 = vmatprep.subr.mxu0 0.0
        %449 = vmatpush1.msra.mxu0 %v323
        %450 = vmatprep.subr.mxu0 0.0
        %451 = vmatpush1.msra.mxu0 %v324
        %452 = vmatprep.subr.mxu0 0.0
        %453 = vmatpush1.msra.mxu0 %v325
        %454 = vmatprep.subr.mxu0 0.0
        %455 = vmatpush1.msra.mxu0 %v326
        %456 = vmatprep.subr.mxu0 0.0
        %457 = vmatpush1.msra.mxu0 %v327
        %458 = vmatprep.subr.mxu0 0.0
        %459 = vmatpush1.msra.mxu0 %v328
        %460 = vmatprep.subr.mxu0 0.0
        %461 = vmatpush1.msra.mxu0 %v329
        %462 = vmatprep.subr.mxu0 0.0
        %463 = vmatpush1.msra.mxu0 %v330
        %464 = vmatprep.subr.mxu0 0.0
        %465 = vmatpush1.msra.mxu0 %v331
        %466 = vmatprep.subr.mxu0 0.0
        %467 = vmatpush1.msra.mxu0 %v332
        %468 = vmatprep.mubr.f32.mxu0 %v296
        %469 = vmatmul.mubr.f32.gmra.mrb[0].mxu0 %v295
        %v470 = vpop.f32.mrb[0].mxu0
        %v471 = vadd.f32 %v402, %v470
        %v472 = vpop.f32.mrb[0].mxu0
        %473 = vdwg.mxu0
        %474 = vmatprep.subr.mxu0 0.0
        %475 = vmatpush1.msra.mxu0 %v333
        %476 = vmatprep.subr.mxu0 0.0
        %477 = vmatpush1.msra.mxu0 %v334
        %478 = vmatprep.subr.mxu0 0.0
        %479 = vmatpush1.msra.mxu0 %v335
        %480 = vmatprep.subr.mxu0 0.0
        %481 = vmatpush1.msra.mxu0 %v336
        %482 = vmatprep.subr.mxu0 0.0
        %483 = vmatpush1.msra.mxu0 %v337
        %484 = vmatprep.subr.mxu0 0.0
        %485 = vmatpush1.msra.mxu0 %v338
        %486 = vmatprep.subr.mxu0 0.0
        %487 = vmatpush1.msra.mxu0 %v339
        %488 = vmatprep.subr.mxu0 0.0
        %489 = vmatpush1.msra.mxu0 %v340
        %490 = vmatprep.subr.mxu0 0.0
        %491 = vmatpush1.msra.mxu0 %v341
        %492 = vmatprep.subr.mxu0 0.0
        %493 = vmatpush1.msra.mxu0 %v342
        %494 = vmatprep.subr.mxu0 0.0
        %495 = vmatpush1.msra.mxu0 %v343
        %496 = vmatprep.subr.mxu0 0.0
        %497 = vmatpush1.msra.mxu0 %v344
        %498 = vmatprep.subr.mxu0 0.0
        %499 = vmatpush1.msra.mxu0 %v345
        %500 = vmatprep.subr.mxu0 0.0
        %501 = vmatpush1.msra.mxu0 %v346
        %502 = vmatprep.subr.mxu0 0.0
        %503 = vmatpush1.msra.mxu0 %v347
        %504 = vmatprep.subr.mxu0 0.0
        %505 = vmatpush1.msra.mxu0 %v348
        %506 = vmatprep.subr.mxu0 0.0
        %507 = vmatpush1.msra.mxu0 %v349
        %508 = vmatprep.subr.mxu0 0.0
        %509 = vmatpush1.msra.mxu0 %v350
        %510 = vmatprep.subr.mxu0 0.0
        %511 = vmatpush1.msra.mxu0 %v351
        %512 = vmatprep.subr.mxu0 0.0
        %513 = vmatpush1.msra.mxu0 %v352
        %514 = vmatprep.subr.mxu0 0.0
        %515 = vmatpush1.msra.mxu0 %v353
        %516 = vmatprep.subr.mxu0 0.0
        %517 = vmatpush1.msra.mxu0 %v354
        %518 = vmatprep.subr.mxu0 0.0
        %519 = vmatpush1.msra.mxu0 %v355
        %520 = vmatprep.subr.mxu0 0.0
        %521 = vmatpush1.msra.mxu0 %v356
        %522 = vmatprep.subr.mxu0 0.0
        %523 = vmatpush1.msra.mxu0 %v357
        %524 = vmatprep.subr.mxu0 0.0
        %525 = vmatpush1.msra.mxu0 %v358
        %526 = vmatprep.subr.mxu0 0.0
        %527 = vmatpush1.msra.mxu0 %v359
        %528 = vmatprep.subr.mxu0 0.0
        %529 = vmatpush1.msra.mxu0 %v360
        %530 = vmatprep.subr.mxu0 0.0
        %531 = vmatpush1.msra.mxu0 %v361
        %532 = vmatprep.subr.mxu0 0.0
        %533 = vmatpush1.msra.mxu0 %v362
        %534 = vmatprep.subr.mxu0 0.0
        %535 = vmatpush1.msra.mxu0 %v363
        %536 = vmatprep.subr.mxu0 0.0
        %537 = vmatpush1.msra.mxu0 %v364
        %538 = vmatprep.mubr.f32.mxu0 %v298
        %539 = vmatmul.mubr.f32.gmra.mrb[0].mxu0 %v297
        %v540 = vpop.f32.mrb[0].mxu0
        %v541 = vadd.f32 %v471, %v540
        %v542 = vpop.f32.mrb[0].mxu0
        %543 = vdwg.mxu0
        %544 = vmatprep.subr.mxu0 0.0
        %545 = vmatpush1.msra.mxu0 %v365
        %546 = vmatprep.subr.mxu0 0.0
        %547 = vmatpush1.msra.mxu0 %v366
        %548 = vmatprep.subr.mxu0 0.0
        %549 = vmatpush1.msra.mxu0 %v367
        %550 = vmatprep.subr.mxu0 0.0
        %551 = vmatpush1.msra.mxu0 %v368
        %552 = vmatprep.subr.mxu0 0.0
        %553 = vmatpush1.msra.mxu0 %v369
        %554 = vmatprep.subr.mxu0 0.0
        %555 = vmatpush1.msra.mxu0 %v370
        %556 = vmatprep.subr.mxu0 0.0
        %557 = vmatpush1.msra.mxu0 %v371
        %558 = vmatprep.subr.mxu0 0.0
        %559 = vmatpush1.msra.mxu0 %v372
        %560 = vmatprep.subr.mxu0 0.0
        %561 = vmatpush1.msra.mxu0 %v373
        %562 = vmatprep.subr.mxu0 0.0
        %563 = vmatpush1.msra.mxu0 %v374
        %564 = vmatprep.subr.mxu0 0.0
        %565 = vmatpush1.msra.mxu0 %v375
        %566 = vmatprep.subr.mxu0 0.0
        %567 = vmatpush1.msra.mxu0 %v376
        %568 = vmatprep.subr.mxu0 0.0
        %569 = vmatpush1.msra.mxu0 %v377
        %570 = vmatprep.subr.mxu0 0.0
        %571 = vmatpush1.msra.mxu0 %v378
        %572 = vmatprep.subr.mxu0 0.0
        %573 = vmatpush1.msra.mxu0 %v379
        %574 = vmatprep.subr.mxu0 0.0
        %575 = vmatpush1.msra.mxu0 %v380
        %576 = vmatprep.subr.mxu0 0.0
        %577 = vmatpush1.msra.mxu0 %v381
        %578 = vmatprep.subr.mxu0 0.0
        %579 = vmatpush1.msra.mxu0 %v382
        %580 = vmatprep.subr.mxu0 0.0
        %581 = vmatpush1.msra.mxu0 %v383
        %582 = vmatprep.subr.mxu0 0.0
        %583 = vmatpush1.msra.mxu0 %v384
        %584 = vmatprep.subr.mxu0 0.0
        %585 = vmatpush1.msra.mxu0 %v385
        %586 = vmatprep.subr.mxu0 0.0
        %587 = vmatpush1.msra.mxu0 %v386
        %588 = vmatprep.subr.mxu0 0.0
        %589 = vmatpush1.msra.mxu0 %v387
        %590 = vmatprep.subr.mxu0 0.0
        %591 = vmatpush1.msra.mxu0 %v388
        %592 = vmatprep.subr.mxu0 0.0
        %593 = vmatpush1.msra.mxu0 %v389
        %594 = vmatprep.subr.mxu0 0.0
        %595 = vmatpush1.msra.mxu0 %v390
        %596 = vmatprep.subr.mxu0 0.0
        %597 = vmatpush1.msra.mxu0 %v391
        %598 = vmatprep.subr.mxu0 0.0
        %599 = vmatpush1.msra.mxu0 %v392
        %600 = vmatprep.subr.mxu0 0.0
        %601 = vmatpush1.msra.mxu0 %v393
        %602 = vmatprep.subr.mxu0 0.0
        %603 = vmatpush1.msra.mxu0 %v394
        %604 = vmatprep.subr.mxu0 0.0
        %605 = vmatpush1.msra.mxu0 %v395
        %606 = vmatprep.subr.mxu0 0.0
        %607 = vmatpush1.msra.mxu0 %v396
        %608 = vmatprep.mubr.f32.mxu0 %v300
        %609 = vmatmul.mubr.f32.gmra.mrb[0].mxu0 %v299
        %v610 = vpop.f32.mrb[0].mxu0
        %v611 = vadd.f32 %v541, %v610
        %v612 = vpop.f32.mrb[0].mxu0
        %613 = vdwg.mxu0
        %v614 = vmax.f32 %v611, 0.0
        %v615 = vld [vmem:[#allocation6] sm:$0xff]
        %v616 = vld [vmem:[#allocation6 + $0x8] sm:$0xff]
        %v617 = vld [vmem:[#allocation6 + $0x10] sm:$0xff]
        %v618 = vld [vmem:[#allocation6 + $0x18] sm:$0xff]
        %v619 = vld [vmem:[#allocation6 + $0x20] sm:$0xff]
        %v620 = vld [vmem:[#allocation6 + $0x28] sm:$0xff]
        %v621 = vld [vmem:[#allocation6 + $0x30] sm:$0xff]
        %v622 = vld [vmem:[#allocation6 + $0x38] sm:$0xff]
        %v623 = vld [vmem:[#allocation6 + $0x40] sm:$0xff]
        %v624 = vld [vmem:[#allocation6 + $0x48] sm:$0xff]
        %v625 = vld [vmem:[#allocation6 + $0x50] sm:$0xff]
        %v626 = vld [vmem:[#allocation6 + $0x58] sm:$0xff]
        %v627 = vld [vmem:[#allocation6 + $0x60] sm:$0xff]
        %v628 = vld [vmem:[#allocation6 + $0x68] sm:$0xff]
        %v629 = vld [vmem:[#allocation6 + $0x70] sm:$0xff]
        %v630 = vld [vmem:[#allocation6 + $0x78] sm:$0xff]
        %v631 = vld [vmem:[%s4] sm:$0x1]
        %v633 = vlaneseq
        %v634 = vshrl.u32 %v633, 7
        %v635 = vsub.s32 0, %v634
        %v636 = vrot.slane %v631, %v635
        %638 = vmatprep.subr.mxu0 0.0
        %639 = vmatpush1.msra.mxu0 %v615
        %640 = vmatprep.subr.mxu0 0.0
        %641 = vmatpush1.msra.mxu0 %v616
        %642 = vmatprep.subr.mxu0 0.0
        %643 = vmatpush1.msra.mxu0 %v617
        %644 = vmatprep.subr.mxu0 0.0
        %645 = vmatpush1.msra.mxu0 %v618
        %646 = vmatprep.subr.mxu0 0.0
        %647 = vmatpush1.msra.mxu0 %v619
        %648 = vmatprep.subr.mxu0 0.0
        %649 = vmatpush1.msra.mxu0 %v620
        %650 = vmatprep.subr.mxu0 0.0
        %651 = vmatpush1.msra.mxu0 %v621
        %652 = vmatprep.subr.mxu0 0.0
        %653 = vmatpush1.msra.mxu0 %v622
        %654 = vmatprep.subr.mxu0 0.0
        %655 = vmatpush1.msra.mxu0 %v623
        %656 = vmatprep.subr.mxu0 0.0
        %657 = vmatpush1.msra.mxu0 %v624
        %658 = vmatprep.subr.mxu0 0.0
        %659 = vmatpush1.msra.mxu0 %v625
        %660 = vmatprep.subr.mxu0 0.0
        %661 = vmatpush1.msra.mxu0 %v626
        %662 = vmatprep.subr.mxu0 0.0
        %663 = vmatpush1.msra.mxu0 %v627
        %664 = vmatprep.subr.mxu0 0.0
        %665 = vmatpush1.msra.mxu0 %v628
        %666 = vmatprep.subr.mxu0 0.0
        %667 = vmatpush1.msra.mxu0 %v629
        %668 = vmatprep.subr.mxu0 0.0
        %669 = vmatpush1.msra.mxu0 %v630
        %670 = vmatprep.subr.mxu0 0.0
        %671 = vmatpush1.msra.mxu0 0.0
        %672 = vmatprep.subr.mxu0 0.0
        %673 = vmatpush1.msra.mxu0 0.0
        %674 = vmatprep.subr.mxu0 0.0
        %675 = vmatpush1.msra.mxu0 0.0
        %676 = vmatprep.subr.mxu0 0.0
        %677 = vmatpush1.msra.mxu0 0.0
        %678 = vmatprep.subr.mxu0 0.0
        %679 = vmatpush1.msra.mxu0 0.0
        %680 = vmatprep.subr.mxu0 0.0
        %681 = vmatpush1.msra.mxu0 0.0
        %682 = vmatprep.subr.mxu0 0.0
        %683 = vmatpush1.msra.mxu0 0.0
        %684 = vmatprep.subr.mxu0 0.0
        %685 = vmatpush1.msra.mxu0 0.0
        %686 = vmatprep.subr.mxu0 0.0
        %687 = vmatpush1.msra.mxu0 0.0
        %688 = vmatprep.subr.mxu0 0.0
        %689 = vmatpush1.msra.mxu0 0.0
        %690 = vmatprep.subr.mxu0 0.0
        %691 = vmatpush1.msra.mxu0 0.0
        %692 = vmatprep.subr.mxu0 0.0
        %693 = vmatpush1.msra.mxu0 0.0
        %694 = vmatprep.subr.mxu0 0.0
        %695 = vmatpush1.msra.mxu0 0.0
        %696 = vmatprep.subr.mxu0 0.0
        %697 = vmatpush1.msra.mxu0 0.0
        %698 = vmatprep.subr.mxu0 0.0
        %699 = vmatpush1.msra.mxu0 0.0
        %700 = vmatprep.subr.mxu0 0.0
        %701 = vmatpush1.msra.mxu0 0.0
        %702 = vmatprep.mubr.f32.mxu0 0.0
        %703 = vmatmul.mubr.f32.gmra.mrb[0].mxu0 %v614
        %v704 = vpop.f32.mrb[0].mxu0
        %v705 = vadd.f32 %v636, %v704
        %v706 = vpop.f32.mrb[0].mxu0
        %707 = vdwg.mxu0
        %708 = vst [vmem:[%s245] sm:$0xff] %v705
        %s709 = sand.u32 %s139, 1
        %s710 = scalar_lea.sflag [#allocation5], %s709
        %s711 = sand.u32 %s139, 1
        %s712 = smul.addr %s711, 8
        %s713 = scalar_lea.vmem [#allocation8], %s712
        // Predicated region
        $region49: #{tpu_custom_call.1} parent=39 // pred_check
          %p714 = pneg %p149
        $region50: #{tpu_custom_call.1} parent=39 // pred_check_branch
          %716 = sbr.rel (%p714) target = $region52
        $region51: #{tpu_custom_call.1} parent=39 // pred_region
          %s718 = ssub.s32 128, 128
          %719 = vsyncadd %s710, %s718
          %s720 = smul.addr %s21, 128
          %s721 = scalar_lea.hbm %s5, %s720
          %s723 = sshll.u32 %s713, 4
          %s724 = int_to_ptr.vmem [resolvable:$true] %s723
          %726 = dma.vmem_to_hbm [thread:$0]  %s724, 128, %s721, %s710
        $region52: #{tpu_custom_call.1} parent=39 // pred_fallthru
          _
      $region40: #{tpu_custom_call.1} parent=5 // pred_fallthru
        _
      %p727 = scmp.le.s32.totalorder 2, %s16
      // Predicated region
      $region53: #{tpu_custom_call.1} parent=5 // pred_check
        %p728 = pneg %p727
      $region54: #{tpu_custom_call.1} parent=5 // pred_check_branch
        %730 = sbr.rel (%p728) target = $region56
      $region55: #{tpu_custom_call.1} parent=5 // pred_region
        %s731 = ssub.s32 %s16, 2
        // Predicated region
        $region57: #{tpu_custom_call.1} parent=55 // pred_check
          %p732 = pneg %p155
        $region58: #{tpu_custom_call.1} parent=55 // pred_check_branch
          %734 = sbr.rel (%p732) target = $region60
        $region59: #{tpu_custom_call.1} parent=55 // pred_region
          %s735 = sand.u32 %s140, 1
          %s736 = scalar_lea.sflag [#allocation5], %s735
          %s737 = sand.u32 %s140, 1
          %s738 = smul.addr %s737, 8
          %s739 = scalar_lea.vmem [#allocation8], %s738
          %740 = dma.done %s736, 128
        $region60: #{tpu_custom_call.1} parent=55 // pred_fallthru
          _
      $region56: #{tpu_custom_call.1} parent=5 // pred_fallthru
        _
    $region6: #{tpu_custom_call.1} parent=1 // loop_footer
      %s20 = sadd.s32 1, %s16
    $region7: #{tpu_custom_call.1} parent=1 // loop_footer_branch
      %15 = sbr.rel target = $region3
    $region8: #{tpu_custom_call.1} parent=1 // loop_exit
      _
    %741 = vsyncpa [#allocation4], 1
    %s742 = scalar_lea.sflag [#allocation4], 1
    %743 = vsyncpa %s742, 1
    %744 = vsyncpa [#allocation7], 1
    %745 = vsyncpa [#allocation5], 1
    %s746 = scalar_lea.sflag [#allocation5], 1
    %747 = vsyncpa %s746, 1

</llo_original>
